<compile_context>
chip_gen: v6e
topology: v6e:2x2x1
jax: 0.10.0
libtpu: 0.0.40
codegen_flags: <defaults>
</compile_context>

<pallas_src>
import functools

import jax
import jax.numpy as jnp
import numpy as np
from jax.experimental import pallas as pl
from jax.experimental.pallas import tpu as pltpu

NUM_EMBEDDINGS = 50  # nn.Embedding(50, num_pos_feats)


def pos_embed_kernel(col_t_ref, row_t_ref, out_ref, *, f, h, w):
    # col_t_ref, row_t_ref: (F, 50) pre-transposed embedding tables (VMEM resident).
    # out_ref: (F, H*W) -- one channel-half of the flattened positional slab.
    half = pl.program_id(0)

    @pl.when(half == 0)
    def _col_half():
        # col_embed(arange(W)).T -> (F, W); the output half is this slab tiled H
        # times along the flattened lane axis: out[f, y*W + x] = col_weight[x, f].
        x_t = col_t_ref[:, 0:w]
        for i in range(h):
            out_ref[:, pl.ds(i * w, w)] = x_t

    @pl.when(half == 1)
    def _row_half():
        # row_embed(arange(H)).T -> (F, H); column y is lane-broadcast across the
        # W positions of its image row: out[f, y*W + x] = row_weight[y, f].
        y_t = row_t_ref[:, 0:h]
        for i in range(h):
            out_ref[:, pl.ds(i * w, w)] = jnp.broadcast_to(y_t[:, i:i + 1], (f, w))


def position_embedding_learned(x, col_weight, row_weight):
    """x: (B, C, H, W). Returns pos: (B, 2*F, H, W) in the weights' dtype."""
    b = x.shape[0]
    h, w = int(x.shape[-2]), int(x.shape[-1])
    n_emb, f = col_weight.shape
    if h > n_emb or w > n_emb:
        raise ValueError(
            f"Spatial size ({h}, {w}) exceeds embedding table size {n_emb}.")
    if f % 8 != 0:
        raise ValueError(f"num_pos_feats={f} must be a multiple of 8.")

    # One-time tiny transposes outside the kernel (removes all in-kernel XLU work).
    col_t = col_weight.T  # (F, 50)
    row_t = row_weight.T  # (F, 50)

    kernel = functools.partial(pos_embed_kernel, f=f, h=h, w=w)
    slab = pl.pallas_call(
        kernel,
        out_shape=jax.ShapeDtypeStruct((2 * f, h * w), col_weight.dtype),
        grid=(2,),  # grid step == channel half (col / row)
        in_specs=[
            pl.BlockSpec((f, n_emb), lambda i: (0, 0)),
            pl.BlockSpec((f, n_emb), lambda i: (0, 0)),
        ],
        out_specs=pl.BlockSpec((f, h * w), lambda i: (i, 0)),
        compiler_params=pltpu.CompilerParams(
            dimension_semantics=("parallel",)),
    )(col_t, row_t)

    # Contiguous reshape (free) back to NCHW and broadcast over batch.
    pos = slab.reshape(2 * f, h, w)
    return jnp.broadcast_to(pos[None], (b, 2 * f, h, w))


def _reference(x, col_weight, row_weight):
    b = x.shape[0]
    h, w = x.shape[-2], x.shape[-1]
    f = col_weight.shape[1]
    x_emb = col_weight[jnp.arange(w)]          # (W, F)
    y_emb = row_weight[jnp.arange(h)]          # (H, F)
    pos = jnp.concatenate(
        [
            jnp.broadcast_to(x_emb[None, :, :], (h, w, f)),
            jnp.broadcast_to(y_emb[:, None, :], (h, w, f)),
        ],
        axis=-1,
    )                                           # (H, W, 2F)
    pos = jnp.transpose(pos, (2, 0, 1))         # (2F, H, W)
    return jnp.broadcast_to(pos[None], (b, 2 * f, h, w))


if __name__ == "__main__":
    num_pos_feats = 32
    B, C, H, W = 2, 4, 16, 16

    key = jax.random.PRNGKey(0)
    k_row, k_col, k_x = jax.random.split(key, 3)
    # nn.init.uniform_ -> U[0, 1)
    row_weight = jax.random.uniform(
        k_row, (NUM_EMBEDDINGS, num_pos_feats), dtype=jnp.float32)
    col_weight = jax.random.uniform(
        k_col, (NUM_EMBEDDINGS, num_pos_feats), dtype=jnp.float32)
    x = jax.random.normal(k_x, (B, C, H, W), dtype=jnp.float32)

    pos = position_embedding_learned(x, col_weight, row_weight)
    pos = jax.block_until_ready(pos)

    ref = _reference(x, col_weight, row_weight)
    np.testing.assert_allclose(np.asarray(pos), np.asarray(ref), rtol=0, atol=0)
    assert pos.shape == (B, 2 * num_pos_feats, H, W)
    assert pos.dtype == jnp.float32

    print("KERNEL_OK")
</pallas_src>

<mosaic_0001>
module attributes {stable_mosaic.version = 11 : i64} {
  func.func @pos_embed_kernel(%arg0: i32, %arg1: memref<32x50xf32, #tpu.memory_space<vmem>>, %arg2: memref<32x50xf32, #tpu.memory_space<vmem>>, %arg3: memref<32x256xf32, #tpu.memory_space<vmem>>) attributes {dimension_semantics = [#tpu.dimension_semantics<parallel>], iteration_bounds = array<i64: 2>, scalar_prefetch = 0 : i64, scratch_operands = 0 : i64, tpu.core_type = #tpu.core_type<tc>, window_params = [{pipeline_mode = #tpu.pipeline_mode<synchronous>, transform_indices = @transform_0, window_bounds = array<i64: 32, 50>}, {pipeline_mode = #tpu.pipeline_mode<synchronous>, transform_indices = @transform_1, window_bounds = array<i64: 32, 50>}, {transform_indices = @transform_2, window_bounds = array<i64: 32, 256>}]} {
    %c0_i32 = arith.constant 0 : i32
    %0 = arith.cmpi eq, %arg0, %c0_i32 : i32
    %1 = arith.extui %0 : i1 to i32
    %c0_i32_0 = arith.constant 0 : i32
    %2 = arith.cmpi ne, %1, %c0_i32_0 : i32
    scf.if %2 {
      %c0 = arith.constant 0 : index
      %c0_2 = arith.constant 0 : index
      %6 = vector.load %arg1[%c0, %c0_2] : memref<32x50xf32, #tpu.memory_space<vmem>>, vector<32x16xf32>
      %c0_3 = arith.constant 0 : index
      %c0_4 = arith.constant 0 : index
      %7 = vector.load %arg3[%c0_3, %c0_4] : memref<32x256xf32, #tpu.memory_space<vmem>>, vector<32x16xf32>
      tpu.vector_store %arg3[%c0_3, %c0_4], %6 {strides = array<i32>} : memref<32x256xf32, #tpu.memory_space<vmem>>, vector<32x16xf32>,
      %c0_5 = arith.constant 0 : index
      %c16 = arith.constant 16 : index
      %8 = vector.load %arg3[%c0_5, %c16] : memref<32x256xf32, #tpu.memory_space<vmem>>, vector<32x16xf32>
      tpu.vector_store %arg3[%c0_5, %c16], %6 {strides = array<i32>} : memref<32x256xf32, #tpu.memory_space<vmem>>, vector<32x16xf32>,
      %c0_6 = arith.constant 0 : index
      %c32 = arith.constant 32 : index
      %9 = vector.load %arg3[%c0_6, %c32] : memref<32x256xf32, #tpu.memory_space<vmem>>, vector<32x16xf32>
      tpu.vector_store %arg3[%c0_6, %c32], %6 {strides = array<i32>} : memref<32x256xf32, #tpu.memory_space<vmem>>, vector<32x16xf32>,
      %c0_7 = arith.constant 0 : index
      %c48 = arith.constant 48 : index
      %10 = vector.load %arg3[%c0_7, %c48] : memref<32x256xf32, #tpu.memory_space<vmem>>, vector<32x16xf32>
      tpu.vector_store %arg3[%c0_7, %c48], %6 {strides = array<i32>} : memref<32x256xf32, #tpu.memory_space<vmem>>, vector<32x16xf32>,
      %c0_8 = arith.constant 0 : index
      %c64 = arith.constant 64 : index
      %11 = vector.load %arg3[%c0_8, %c64] : memref<32x256xf32, #tpu.memory_space<vmem>>, vector<32x16xf32>
      tpu.vector_store %arg3[%c0_8, %c64], %6 {strides = array<i32>} : memref<32x256xf32, #tpu.memory_space<vmem>>, vector<32x16xf32>,
      %c0_9 = arith.constant 0 : index
      %c80 = arith.constant 80 : index
      %12 = vector.load %arg3[%c0_9, %c80] : memref<32x256xf32, #tpu.memory_space<vmem>>, vector<32x16xf32>
      tpu.vector_store %arg3[%c0_9, %c80], %6 {strides = array<i32>} : memref<32x256xf32, #tpu.memory_space<vmem>>, vector<32x16xf32>,
      %c0_10 = arith.constant 0 : index
      %c96 = arith.constant 96 : index
      %13 = vector.load %arg3[%c0_10, %c96] : memref<32x256xf32, #tpu.memory_space<vmem>>, vector<32x16xf32>
      tpu.vector_store %arg3[%c0_10, %c96], %6 {strides = array<i32>} : memref<32x256xf32, #tpu.memory_space<vmem>>, vector<32x16xf32>,
      %c0_11 = arith.constant 0 : index
      %c112 = arith.constant 112 : index
      %14 = vector.load %arg3[%c0_11, %c112] : memref<32x256xf32, #tpu.memory_space<vmem>>, vector<32x16xf32>
      tpu.vector_store %arg3[%c0_11, %c112], %6 {strides = array<i32>} : memref<32x256xf32, #tpu.memory_space<vmem>>, vector<32x16xf32>,
      %c0_12 = arith.constant 0 : index
      %c128 = arith.constant 128 : index
      %15 = vector.load %arg3[%c0_12, %c128] : memref<32x256xf32, #tpu.memory_space<vmem>>, vector<32x16xf32>
      tpu.vector_store %arg3[%c0_12, %c128], %6 {strides = array<i32>} : memref<32x256xf32, #tpu.memory_space<vmem>>, vector<32x16xf32>,
      %c0_13 = arith.constant 0 : index
      %c144 = arith.constant 144 : index
      %16 = vector.load %arg3[%c0_13, %c144] : memref<32x256xf32, #tpu.memory_space<vmem>>, vector<32x16xf32>
      tpu.vector_store %arg3[%c0_13, %c144], %6 {strides = array<i32>} : memref<32x256xf32, #tpu.memory_space<vmem>>, vector<32x16xf32>,
      %c0_14 = arith.constant 0 : index
      %c160 = arith.constant 160 : index
      %17 = vector.load %arg3[%c0_14, %c160] : memref<32x256xf32, #tpu.memory_space<vmem>>, vector<32x16xf32>
      tpu.vector_store %arg3[%c0_14, %c160], %6 {strides = array<i32>} : memref<32x256xf32, #tpu.memory_space<vmem>>, vector<32x16xf32>,
      %c0_15 = arith.constant 0 : index
      %c176 = arith.constant 176 : index
      %18 = vector.load %arg3[%c0_15, %c176] : memref<32x256xf32, #tpu.memory_space<vmem>>, vector<32x16xf32>
      tpu.vector_store %arg3[%c0_15, %c176], %6 {strides = array<i32>} : memref<32x256xf32, #tpu.memory_space<vmem>>, vector<32x16xf32>,
      %c0_16 = arith.constant 0 : index
      %c192 = arith.constant 192 : index
      %19 = vector.load %arg3[%c0_16, %c192] : memref<32x256xf32, #tpu.memory_space<vmem>>, vector<32x16xf32>
      tpu.vector_store %arg3[%c0_16, %c192], %6 {strides = array<i32>} : memref<32x256xf32, #tpu.memory_space<vmem>>, vector<32x16xf32>,
      %c0_17 = arith.constant 0 : index
      %c208 = arith.constant 208 : index
      %20 = vector.load %arg3[%c0_17, %c208] : memref<32x256xf32, #tpu.memory_space<vmem>>, vector<32x16xf32>
      tpu.vector_store %arg3[%c0_17, %c208], %6 {strides = array<i32>} : memref<32x256xf32, #tpu.memory_space<vmem>>, vector<32x16xf32>,
      %c0_18 = arith.constant 0 : index
      %c224 = arith.constant 224 : index
      %21 = vector.load %arg3[%c0_18, %c224] : memref<32x256xf32, #tpu.memory_space<vmem>>, vector<32x16xf32>
      tpu.vector_store %arg3[%c0_18, %c224], %6 {strides = array<i32>} : memref<32x256xf32, #tpu.memory_space<vmem>>, vector<32x16xf32>,
      %c0_19 = arith.constant 0 : index
      %c240 = arith.constant 240 : index
      %22 = vector.load %arg3[%c0_19, %c240] : memref<32x256xf32, #tpu.memory_space<vmem>>, vector<32x16xf32>
      tpu.vector_store %arg3[%c0_19, %c240], %6 {strides = array<i32>} : memref<32x256xf32, #tpu.memory_space<vmem>>, vector<32x16xf32>,
    } else {
    }
    %c1_i32 = arith.constant 1 : i32
    %3 = arith.cmpi eq, %arg0, %c1_i32 : i32
    %4 = arith.extui %3 : i1 to i32
    %c0_i32_1 = arith.constant 0 : i32
    %5 = arith.cmpi ne, %4, %c0_i32_1 : i32
    scf.if %5 {
      %c0 = arith.constant 0 : index
      %c0_2 = arith.constant 0 : index
      %6 = vector.load %arg2[%c0, %c0_2] : memref<32x50xf32, #tpu.memory_space<vmem>>, vector<32x16xf32>
      %7 = vector.extract_strided_slice %6 {offsets = [0, 0], sizes = [32, 1], strides = [1, 1]} : vector<32x16xf32> to vector<32x1xf32>
      %8 = vector.shape_cast %7 : vector<32x1xf32> to vector<32x1xf32>
      %9 = vector.broadcast %8 : vector<32x1xf32> to vector<32x16xf32>
      %c0_3 = arith.constant 0 : index
      %c0_4 = arith.constant 0 : index
      %10 = vector.load %arg3[%c0_3, %c0_4] : memref<32x256xf32, #tpu.memory_space<vmem>>, vector<32x16xf32>
      tpu.vector_store %arg3[%c0_3, %c0_4], %9 {strides = array<i32>} : memref<32x256xf32, #tpu.memory_space<vmem>>, vector<32x16xf32>,
      %11 = vector.extract_strided_slice %6 {offsets = [0, 1], sizes = [32, 1], strides = [1, 1]} : vector<32x16xf32> to vector<32x1xf32>
      %12 = vector.shape_cast %11 : vector<32x1xf32> to vector<32x1xf32>
      %13 = vector.broadcast %12 : vector<32x1xf32> to vector<32x16xf32>
      %c0_5 = arith.constant 0 : index
      %c16 = arith.constant 16 : index
      %14 = vector.load %arg3[%c0_5, %c16] : memref<32x256xf32, #tpu.memory_space<vmem>>, vector<32x16xf32>
      tpu.vector_store %arg3[%c0_5, %c16], %13 {strides = array<i32>} : memref<32x256xf32, #tpu.memory_space<vmem>>, vector<32x16xf32>,
      %15 = vector.extract_strided_slice %6 {offsets = [0, 2], sizes = [32, 1], strides = [1, 1]} : vector<32x16xf32> to vector<32x1xf32>
      %16 = vector.shape_cast %15 : vector<32x1xf32> to vector<32x1xf32>
      %17 = vector.broadcast %16 : vector<32x1xf32> to vector<32x16xf32>
      %c0_6 = arith.constant 0 : index
      %c32 = arith.constant 32 : index
      %18 = vector.load %arg3[%c0_6, %c32] : memref<32x256xf32, #tpu.memory_space<vmem>>, vector<32x16xf32>
      tpu.vector_store %arg3[%c0_6, %c32], %17 {strides = array<i32>} : memref<32x256xf32, #tpu.memory_space<vmem>>, vector<32x16xf32>,
      %19 = vector.extract_strided_slice %6 {offsets = [0, 3], sizes = [32, 1], strides = [1, 1]} : vector<32x16xf32> to vector<32x1xf32>
      %20 = vector.shape_cast %19 : vector<32x1xf32> to vector<32x1xf32>
      %21 = vector.broadcast %20 : vector<32x1xf32> to vector<32x16xf32>
      %c0_7 = arith.constant 0 : index
      %c48 = arith.constant 48 : index
      %22 = vector.load %arg3[%c0_7, %c48] : memref<32x256xf32, #tpu.memory_space<vmem>>, vector<32x16xf32>
      tpu.vector_store %arg3[%c0_7, %c48], %21 {strides = array<i32>} : memref<32x256xf32, #tpu.memory_space<vmem>>, vector<32x16xf32>,
      %23 = vector.extract_strided_slice %6 {offsets = [0, 4], sizes = [32, 1], strides = [1, 1]} : vector<32x16xf32> to vector<32x1xf32>
      %24 = vector.shape_cast %23 : vector<32x1xf32> to vector<32x1xf32>
      %25 = vector.broadcast %24 : vector<32x1xf32> to vector<32x16xf32>
      %c0_8 = arith.constant 0 : index
      %c64 = arith.constant 64 : index
      %26 = vector.load %arg3[%c0_8, %c64] : memref<32x256xf32, #tpu.memory_space<vmem>>, vector<32x16xf32>
      tpu.vector_store %arg3[%c0_8, %c64], %25 {strides = array<i32>} : memref<32x256xf32, #tpu.memory_space<vmem>>, vector<32x16xf32>,
      %27 = vector.extract_strided_slice %6 {offsets = [0, 5], sizes = [32, 1], strides = [1, 1]} : vector<32x16xf32> to vector<32x1xf32>
      %28 = vector.shape_cast %27 : vector<32x1xf32> to vector<32x1xf32>
      %29 = vector.broadcast %28 : vector<32x1xf32> to vector<32x16xf32>
      %c0_9 = arith.constant 0 : index
      %c80 = arith.constant 80 : index
      %30 = vector.load %arg3[%c0_9, %c80] : memref<32x256xf32, #tpu.memory_space<vmem>>, vector<32x16xf32>
      tpu.vector_store %arg3[%c0_9, %c80], %29 {strides = array<i32>} : memref<32x256xf32, #tpu.memory_space<vmem>>, vector<32x16xf32>,
      %31 = vector.extract_strided_slice %6 {offsets = [0, 6], sizes = [32, 1], strides = [1, 1]} : vector<32x16xf32> to vector<32x1xf32>
      %32 = vector.shape_cast %31 : vector<32x1xf32> to vector<32x1xf32>
      %33 = vector.broadcast %32 : vector<32x1xf32> to vector<32x16xf32>
      %c0_10 = arith.constant 0 : index
      %c96 = arith.constant 96 : index
      %34 = vector.load %arg3[%c0_10, %c96] : memref<32x256xf32, #tpu.memory_space<vmem>>, vector<32x16xf32>
      tpu.vector_store %arg3[%c0_10, %c96], %33 {strides = array<i32>} : memref<32x256xf32, #tpu.memory_space<vmem>>, vector<32x16xf32>,
      %35 = vector.extract_strided_slice %6 {offsets = [0, 7], sizes = [32, 1], strides = [1, 1]} : vector<32x16xf32> to vector<32x1xf32>
      %36 = vector.shape_cast %35 : vector<32x1xf32> to vector<32x1xf32>
      %37 = vector.broadcast %36 : vector<32x1xf32> to vector<32x16xf32>
      %c0_11 = arith.constant 0 : index
      %c112 = arith.constant 112 : index
      %38 = vector.load %arg3[%c0_11, %c112] : memref<32x256xf32, #tpu.memory_space<vmem>>, vector<32x16xf32>
      tpu.vector_store %arg3[%c0_11, %c112], %37 {strides = array<i32>} : memref<32x256xf32, #tpu.memory_space<vmem>>, vector<32x16xf32>,
      %39 = vector.extract_strided_slice %6 {offsets = [0, 8], sizes = [32, 1], strides = [1, 1]} : vector<32x16xf32> to vector<32x1xf32>
      %40 = vector.shape_cast %39 : vector<32x1xf32> to vector<32x1xf32>
      %41 = vector.broadcast %40 : vector<32x1xf32> to vector<32x16xf32>
      %c0_12 = arith.constant 0 : index
      %c128 = arith.constant 128 : index
      %42 = vector.load %arg3[%c0_12, %c128] : memref<32x256xf32, #tpu.memory_space<vmem>>, vector<32x16xf32>
      tpu.vector_store %arg3[%c0_12, %c128], %41 {strides = array<i32>} : memref<32x256xf32, #tpu.memory_space<vmem>>, vector<32x16xf32>,
      %43 = vector.extract_strided_slice %6 {offsets = [0, 9], sizes = [32, 1], strides = [1, 1]} : vector<32x16xf32> to vector<32x1xf32>
      %44 = vector.shape_cast %43 : vector<32x1xf32> to vector<32x1xf32>
      %45 = vector.broadcast %44 : vector<32x1xf32> to vector<32x16xf32>
      %c0_13 = arith.constant 0 : index
      %c144 = arith.constant 144 : index
      %46 = vector.load %arg3[%c0_13, %c144] : memref<32x256xf32, #tpu.memory_space<vmem>>, vector<32x16xf32>
      tpu.vector_store %arg3[%c0_13, %c144], %45 {strides = array<i32>} : memref<32x256xf32, #tpu.memory_space<vmem>>, vector<32x16xf32>,
      %47 = vector.extract_strided_slice %6 {offsets = [0, 10], sizes = [32, 1], strides = [1, 1]} : vector<32x16xf32> to vector<32x1xf32>
      %48 = vector.shape_cast %47 : vector<32x1xf32> to vector<32x1xf32>
      %49 = vector.broadcast %48 : vector<32x1xf32> to vector<32x16xf32>
      %c0_14 = arith.constant 0 : index
      %c160 = arith.constant 160 : index
      %50 = vector.load %arg3[%c0_14, %c160] : memref<32x256xf32, #tpu.memory_space<vmem>>, vector<32x16xf32>
      tpu.vector_store %arg3[%c0_14, %c160], %49 {strides = array<i32>} : memref<32x256xf32, #tpu.memory_space<vmem>>, vector<32x16xf32>,
      %51 = vector.extract_strided_slice %6 {offsets = [0, 11], sizes = [32, 1], strides = [1, 1]} : vector<32x16xf32> to vector<32x1xf32>
      %52 = vector.shape_cast %51 : vector<32x1xf32> to vector<32x1xf32>
      %53 = vector.broadcast %52 : vector<32x1xf32> to vector<32x16xf32>
      %c0_15 = arith.constant 0 : index
      %c176 = arith.constant 176 : index
      %54 = vector.load %arg3[%c0_15, %c176] : memref<32x256xf32, #tpu.memory_space<vmem>>, vector<32x16xf32>
      tpu.vector_store %arg3[%c0_15, %c176], %53 {strides = array<i32>} : memref<32x256xf32, #tpu.memory_space<vmem>>, vector<32x16xf32>,
      %55 = vector.extract_strided_slice %6 {offsets = [0, 12], sizes = [32, 1], strides = [1, 1]} : vector<32x16xf32> to vector<32x1xf32>
      %56 = vector.shape_cast %55 : vector<32x1xf32> to vector<32x1xf32>
      %57 = vector.broadcast %56 : vector<32x1xf32> to vector<32x16xf32>
      %c0_16 = arith.constant 0 : index
      %c192 = arith.constant 192 : index
      %58 = vector.load %arg3[%c0_16, %c192] : memref<32x256xf32, #tpu.memory_space<vmem>>, vector<32x16xf32>
      tpu.vector_store %arg3[%c0_16, %c192], %57 {strides = array<i32>} : memref<32x256xf32, #tpu.memory_space<vmem>>, vector<32x16xf32>,
      %59 = vector.extract_strided_slice %6 {offsets = [0, 13], sizes = [32, 1], strides = [1, 1]} : vector<32x16xf32> to vector<32x1xf32>
      %60 = vector.shape_cast %59 : vector<32x1xf32> to vector<32x1xf32>
      %61 = vector.broadcast %60 : vector<32x1xf32> to vector<32x16xf32>
      %c0_17 = arith.constant 0 : index
      %c208 = arith.constant 208 : index
      %62 = vector.load %arg3[%c0_17, %c208] : memref<32x256xf32, #tpu.memory_space<vmem>>, vector<32x16xf32>
      tpu.vector_store %arg3[%c0_17, %c208], %61 {strides = array<i32>} : memref<32x256xf32, #tpu.memory_space<vmem>>, vector<32x16xf32>,
      %63 = vector.extract_strided_slice %6 {offsets = [0, 14], sizes = [32, 1], strides = [1, 1]} : vector<32x16xf32> to vector<32x1xf32>
      %64 = vector.shape_cast %63 : vector<32x1xf32> to vector<32x1xf32>
      %65 = vector.broadcast %64 : vector<32x1xf32> to vector<32x16xf32>
      %c0_18 = arith.constant 0 : index
      %c224 = arith.constant 224 : index
      %66 = vector.load %arg3[%c0_18, %c224] : memref<32x256xf32, #tpu.memory_space<vmem>>, vector<32x16xf32>
      tpu.vector_store %arg3[%c0_18, %c224], %65 {strides = array<i32>} : memref<32x256xf32, #tpu.memory_space<vmem>>, vector<32x16xf32>,
      %67 = vector.extract_strided_slice %6 {offsets = [0, 15], sizes = [32, 1], strides = [1, 1]} : vector<32x16xf32> to vector<32x1xf32>
      %68 = vector.shape_cast %67 : vector<32x1xf32> to vector<32x1xf32>
      %69 = vector.broadcast %68 : vector<32x1xf32> to vector<32x16xf32>
      %c0_19 = arith.constant 0 : index
      %c240 = arith.constant 240 : index
      %70 = vector.load %arg3[%c0_19, %c240] : memref<32x256xf32, #tpu.memory_space<vmem>>, vector<32x16xf32>
      tpu.vector_store %arg3[%c0_19, %c240], %69 {strides = array<i32>} : memref<32x256xf32, #tpu.memory_space<vmem>>, vector<32x16xf32>,
    } else {
    }
    return
  }
  func.func @transform_0(%arg0: i32) -> (i32, i32) {
    %c0_i32 = arith.constant 0 : i32
    %c0_i32_0 = arith.constant 0 : i32
    %c0_i32_1 = arith.constant 0 : i32
    return %c0_i32, %c0_i32_0 : i32, i32
  }
  func.func @transform_1(%arg0: i32) -> (i32, i32) {
    %c0_i32 = arith.constant 0 : i32
    %c0_i32_0 = arith.constant 0 : i32
    %c0_i32_1 = arith.constant 0 : i32
    return %c0_i32, %c0_i32_0 : i32, i32
  }
  func.func @transform_2(%arg0: i32) -> (i32, i32) {
    %c0_i32 = arith.constant 0 : i32
    %c0_i32_0 = arith.constant 0 : i32
    return %arg0, %c0_i32 : i32, i32
  }
}

</mosaic_0001>

<llo_original>
// kernel: tpu_custom_call.1
$region0: #{tpu_custom_call.1}
  #allocation0 [shape = 'u32[]', space=smem, size = 0x4, offset = 0x4, fixed_abs, tag = 'smem constant byte address 0x4 - core index']
  #allocation1 [shape = 'u32[144,128]{1,0:T(1,128)}', space=vmem, size = 0x12000, scoped, tag = 'internal scratch']
  %s0 = inlined_call_operand.hbm [shape: f32[32,50], index: 0, kind: input, shape index: {}]
  %s1 = inlined_call_operand.hbm [shape: f32[32,50], index: 1, kind: input, shape index: {}]
  %s2 = inlined_call_operand.hbm [shape: f32[64,256], index: 2, kind: output, shape index: {}]
  %s3 = sld [smem:[#allocation0]]
  $region57: #{tpu_custom_call.1} parent=0
    _
  %s5 = ssub.s32 1, %s3
  %s6 = scalar_select 0, %s5, %s3
  $region1: #{tpu_custom_call.1} parent=0
    #allocation2 [shape = 'u8[16384]{0}', space=vmem, size = 0x4000, scoped, tag = 'input window, operand 0, single buffered']
    #allocation3 [shape = 's32[2]{0}', space=sflag, size = 0x8, scoped, tag = 'scoped memory for tpu_custom_call.1']
    #allocation4 [shape = 's32[2]{0}', space=sflag, size = 0x8, scoped, tag = 'scoped memory for tpu_custom_call.1']
    #allocation5 [shape = 'u8[16384]{0}', space=vmem, size = 0x4000, scoped, tag = 'input window, operand 1, single buffered']
    #allocation6 [shape = 's32[1]{0}', space=sflag, size = 0x4, scoped, tag = 'scoped memory for tpu_custom_call.1']
    #allocation7 [shape = 'u8[65536]{0}', space=vmem, size = 0x10000, scoped, tag = 'output window, operand 0']
    %7 = vsyncpa [#allocation3], 0
    %8 = vsyncpa [#allocation6], 0
    %9 = vsyncpa [#allocation4], 0
    %s10 = scalar_lea.sflag [#allocation4], 1
    %11 = vsyncpa %s10, 0
    loop: start=0, step=1, limit=4
    $region2: #{tpu_custom_call.1} parent=1 // loop_pre_header
      _
    $region3: #{tpu_custom_call.1} parent=1 // loop_header
      %s13 = sphi 0, %s17
      %p14 = scmp.ge.s32.totalorder %s13, 4
      %s21 = sphi 0, %s21
      %s23 = sphi 0, %s21
      %s24 = sphi 0, %s23
      %s38 = sphi 0, %s24
      %s42 = sphi 0, %s42
      %s44 = sphi 0, %s42
      %s45 = sphi 0, %s44
      %s59 = sphi 0, %s45
      %s65 = sphi 0, %s67
      %s68 = sphi 0, %s65
      %s69 = sphi 0, %s68
      %s85 = sphi 0, %s69
    $region4: #{tpu_custom_call.1} parent=1 // loop_header_branch
      %16 = sbr.rel (%p14) target = $region8
    $region5: #{tpu_custom_call.1} parent=1 // loop_body
      %s18 = ssub.s32 %s13, 1
      %s19 = ssub.s32 %s13, 2
      %s20 = sadd.s32 %s13, 1
      %s22 = sadd.s32 %s21, 1
      %p25 = scmp.eq.s32.totalorder %s13, 1
      %p26 = scmp.ne.s32.totalorder %s21, %s23
      %p27 = scmp.eq.s32.totalorder %s13, 0
      %p28 = por %p26, %p27
      %p29 = scmp.ne.s32.totalorder %s21, %s23
      %p30 = scmp.eq.s32.totalorder %s18, 1
      %p31 = por %p29, %p30
      %p32 = scmp.ne.s32.totalorder %s23, %s24
      %p33 = scmp.eq.s32.totalorder %s18, 0
      %p34 = por %p32, %p33
      %p35 = scmp.ne.s32.totalorder %s23, %s24
      %p36 = scmp.eq.s32.totalorder %s19, 1
      %p37 = por %p35, %p36
      %p39 = scmp.ne.s32.totalorder %s24, %s38
      %p40 = scmp.eq.s32.totalorder %s19, 0
      %p41 = por %p39, %p40
      %s43 = sadd.s32 %s42, 1
      %p46 = scmp.eq.s32.totalorder %s13, 1
      %p47 = scmp.ne.s32.totalorder %s42, %s44
      %p48 = scmp.eq.s32.totalorder %s13, 0
      %p49 = por %p47, %p48
      %p50 = scmp.ne.s32.totalorder %s42, %s44
      %p51 = scmp.eq.s32.totalorder %s18, 1
      %p52 = por %p50, %p51
      %p53 = scmp.ne.s32.totalorder %s44, %s45
      %p54 = scmp.eq.s32.totalorder %s18, 0
      %p55 = por %p53, %p54
      %p56 = scmp.ne.s32.totalorder %s44, %s45
      %p57 = scmp.eq.s32.totalorder %s19, 1
      %p58 = por %p56, %p57
      %p60 = scmp.ne.s32.totalorder %s45, %s59
      %p61 = scmp.eq.s32.totalorder %s19, 0
      %p62 = por %p60, %p61
      %s63 = ssub.s32 %s13, %s20
      %p64 = scmp.eq.s32.totalorder %s63, 0
      %s66 = sadd.s32 %s65, 1
      %s67 = scalar_select %p64, %s65, %s66
      %p70 = pneg %p64
      %p71 = scmp.eq.s32.totalorder %s13, 1
      %p72 = por %p70, %p71
      %p73 = scmp.ne.s32.totalorder %s65, %s68
      %p74 = scmp.eq.s32.totalorder %s13, 0
      %p75 = por %p73, %p74
      %p76 = scmp.ne.s32.totalorder %s65, %s68
      %p77 = scmp.eq.s32.totalorder %s18, 1
      %p78 = por %p76, %p77
      %p79 = scmp.ne.s32.totalorder %s68, %s69
      %p80 = scmp.eq.s32.totalorder %s18, 0
      %p81 = por %p79, %p80
      %p82 = scmp.ne.s32.totalorder %s68, %s69
      %p83 = scmp.eq.s32.totalorder %s19, 1
      %p84 = por %p82, %p83
      %p86 = scmp.ne.s32.totalorder %s69, %s85
      %p87 = scmp.eq.s32.totalorder %s19, 0
      %p88 = por %p86, %p87
      %p89 = scmp.le.s32.totalorder 1, %s13
      %p90 = scmp.lt.s32.totalorder %s13, 3
      %p91 = pnand %p89, %p90
      %p92 = pneg %p91
      // Predicated region
      $region9: #{tpu_custom_call.1} parent=5 // pred_check
        _
      $region10: #{tpu_custom_call.1} parent=5 // pred_check_branch
        %94 = sbr.rel (%p91) target = $region12
      $region11: #{tpu_custom_call.1} parent=5 // pred_region
        %s95 = ssub.s32 %s13, 1
        // Predicated region
        $region13: #{tpu_custom_call.1} parent=11 // pred_check
          %p96 = pneg %p34
        $region14: #{tpu_custom_call.1} parent=11 // pred_check_branch
          %98 = sbr.rel (%p96) target = $region16
        $region15: #{tpu_custom_call.1} parent=11 // pred_region
          %s100 = ssub.s32 512, 512
          %101 = vsyncadd [#allocation3], %s100
          %s102 = sshll.u32 [#allocation2], 4
          %s103 = int_to_ptr.vmem [resolvable:$true] %s102
          %108 = dma.hbm_to_vmem [thread:$0]  %s0, 512, %s103, [#allocation3], 128, 128, 8
        $region16: #{tpu_custom_call.1} parent=11 // pred_fallthru
          _
        // Predicated region
        $region17: #{tpu_custom_call.1} parent=11 // pred_check
          %p109 = pneg %p55
        $region18: #{tpu_custom_call.1} parent=11 // pred_check_branch
          %111 = sbr.rel (%p109) target = $region20
        $region19: #{tpu_custom_call.1} parent=11 // pred_region
          %s113 = ssub.s32 512, 512
          %114 = vsyncadd [#allocation6], %s113
          %s115 = sshll.u32 [#allocation5], 4
          %s116 = int_to_ptr.vmem [resolvable:$true] %s115
          %121 = dma.hbm_to_vmem [thread:$0]  %s1, 512, %s116, [#allocation6], 128, 128, 8
        $region20: #{tpu_custom_call.1} parent=11 // pred_fallthru
          _
      $region12: #{tpu_custom_call.1} parent=5 // pred_fallthru
        _
      %p122 = scmp.lt.s32.totalorder %s13, 2
      // Predicated region
      $region21: #{tpu_custom_call.1} parent=5 // pred_check
        %p123 = pneg %p122
      $region22: #{tpu_custom_call.1} parent=5 // pred_check_branch
        %125 = sbr.rel (%p123) target = $region24
      $region23: #{tpu_custom_call.1} parent=5 // pred_region
        _
      $region24: #{tpu_custom_call.1} parent=5 // pred_fallthru
        _
      %p126 = scmp.le.s32.totalorder 1, %s13
      %p127 = scmp.lt.s32.totalorder %s13, 3
      %p128 = pnand %p126, %p127
      %p129 = pneg %p128
      // Predicated region
      $region25: #{tpu_custom_call.1} parent=5 // pred_check
        _
      $region26: #{tpu_custom_call.1} parent=5 // pred_check_branch
        %131 = sbr.rel (%p128) target = $region28
      $region27: #{tpu_custom_call.1} parent=5 // pred_region
        %s132 = ssub.s32 %s13, 1
        // Predicated region
        $region29: #{tpu_custom_call.1} parent=27 // pred_check
          %p133 = pneg %p34
        $region30: #{tpu_custom_call.1} parent=27 // pred_check_branch
          %135 = sbr.rel (%p133) target = $region32
        $region31: #{tpu_custom_call.1} parent=27 // pred_region
          %136 = dma.done [#allocation3], 512
        $region32: #{tpu_custom_call.1} parent=27 // pred_fallthru
          _
        // Predicated region
        $region33: #{tpu_custom_call.1} parent=27 // pred_check
          %p137 = pneg %p55
        $region34: #{tpu_custom_call.1} parent=27 // pred_check_branch
          %139 = sbr.rel (%p137) target = $region36
        $region35: #{tpu_custom_call.1} parent=27 // pred_region
          %140 = dma.done [#allocation6], 512
        $region36: #{tpu_custom_call.1} parent=27 // pred_fallthru
          _
        %p141 = pneg %p34
        %p142 = pneg %p31
        %p143 = pneg %p55
        %p144 = pneg %p52
        %p145 = pneg %p81
        %p146 = pneg %p78
        %s147 = sand.u32 %s68, 1
        %s148 = scalar_lea.sflag [#allocation4], %s147
        %s149 = sand.u32 %s68, 1
        %s150 = smul.addr %s149, 64
        %s151 = scalar_lea.vmem [#allocation7], %s150
        %s152 = smul.u32 4, %s18
        %p153 = scmp.eq.s32.totalorder %s18, 0
        // Predicated region
        $region37: #{tpu_custom_call.1} parent=27 // pred_check
          %p154 = pneg %p153
        $region38: #{tpu_custom_call.1} parent=27 // pred_check_branch
          %156 = sbr.rel (%p154) target = $region40
        $region39: #{tpu_custom_call.1} parent=27 // pred_region
          %v157 = vld [vmem:[#allocation2] sm:$0xff]
          %v158 = vld [vmem:[#allocation2 + $0x8] sm:$0xff]
          %v159 = vld [vmem:[#allocation2 + $0x10] sm:$0xff]
          %v160 = vld [vmem:[#allocation2 + $0x18] sm:$0xff]
          %vm161 = vcmask 130048
          %162 = vst.msk [vmem:[%s151] sm:$0xff] %vm161, %v157
          %163 = vst.msk [vmem:[%s151 + $0x10] sm:$0xff] %vm161, %v158
          %164 = vst.msk [vmem:[%s151 + $0x20] sm:$0xff] %vm161, %v159
          %165 = vst.msk [vmem:[%s151 + $0x30] sm:$0xff] %vm161, %v160
          %170 = vrot.lane.b32.xlu0 %v157, 16
          %v171 = vpop.permute.xlu0 %170
          %172 = vrot.lane.b32.xlu0 %v158, 16
          %v173 = vpop.permute.xlu0 %172
          %174 = vrot.lane.b32.xlu0 %v159, 16
          %v175 = vpop.permute.xlu0 %174
          %176 = vrot.lane.b32.xlu0 %v160, 16
          %v177 = vpop.permute.xlu0 %176
          %vm182 = vcmask 261248
          %183 = vst.msk [vmem:[%s151] sm:$0xff] %vm182, %v171
          %184 = vst.msk [vmem:[%s151 + $0x10] sm:$0xff] %vm182, %v173
          %185 = vst.msk [vmem:[%s151 + $0x20] sm:$0xff] %vm182, %v175
          %186 = vst.msk [vmem:[%s151 + $0x30] sm:$0xff] %vm182, %v177
          %187 = vrot.lane.b32.xlu0 %v157, 32
          %v188 = vpop.permute.xlu0 %187
          %189 = vrot.lane.b32.xlu0 %v158, 32
          %v190 = vpop.permute.xlu0 %189
          %191 = vrot.lane.b32.xlu0 %v159, 32
          %v192 = vpop.permute.xlu0 %191
          %193 = vrot.lane.b32.xlu0 %v160, 32
          %v194 = vpop.permute.xlu0 %193
          %vm199 = vcmask 392448
          %200 = vst.msk [vmem:[%s151] sm:$0xff] %vm199, %v188
          %201 = vst.msk [vmem:[%s151 + $0x10] sm:$0xff] %vm199, %v190
          %202 = vst.msk [vmem:[%s151 + $0x20] sm:$0xff] %vm199, %v192
          %203 = vst.msk [vmem:[%s151 + $0x30] sm:$0xff] %vm199, %v194
          %204 = vrot.lane.b32.xlu0 %v157, 48
          %v205 = vpop.permute.xlu0 %204
          %206 = vrot.lane.b32.xlu0 %v158, 48
          %v207 = vpop.permute.xlu0 %206
          %208 = vrot.lane.b32.xlu0 %v159, 48
          %v209 = vpop.permute.xlu0 %208
          %210 = vrot.lane.b32.xlu0 %v160, 48
          %v211 = vpop.permute.xlu0 %210
          %vm216 = vcmask 523648
          %217 = vst.msk [vmem:[%s151] sm:$0xff] %vm216, %v205
          %218 = vst.msk [vmem:[%s151 + $0x10] sm:$0xff] %vm216, %v207
          %219 = vst.msk [vmem:[%s151 + $0x20] sm:$0xff] %vm216, %v209
          %220 = vst.msk [vmem:[%s151 + $0x30] sm:$0xff] %vm216, %v211
          %221 = vrot.lane.b32.xlu0 %v157, 64
          %v222 = vpop.permute.xlu0 %221
          %223 = vrot.lane.b32.xlu0 %v158, 64
          %v224 = vpop.permute.xlu0 %223
          %225 = vrot.lane.b32.xlu0 %v159, 64
          %v226 = vpop.permute.xlu0 %225
          %227 = vrot.lane.b32.xlu0 %v160, 64
          %v228 = vpop.permute.xlu0 %227
          %vm233 = vcmask 654848
          %234 = vst.msk [vmem:[%s151] sm:$0xff] %vm233, %v222
          %235 = vst.msk [vmem:[%s151 + $0x10] sm:$0xff] %vm233, %v224
          %236 = vst.msk [vmem:[%s151 + $0x20] sm:$0xff] %vm233, %v226
          %237 = vst.msk [vmem:[%s151 + $0x30] sm:$0xff] %vm233, %v228
          %238 = vrot.lane.b32.xlu0 %v157, 80
          %v239 = vpop.permute.xlu0 %238
          %240 = vrot.lane.b32.xlu0 %v158, 80
          %v241 = vpop.permute.xlu0 %240
          %242 = vrot.lane.b32.xlu0 %v159, 80
          %v243 = vpop.permute.xlu0 %242
          %244 = vrot.lane.b32.xlu0 %v160, 80
          %v245 = vpop.permute.xlu0 %244
          %vm250 = vcmask 786048
          %251 = vst.msk [vmem:[%s151] sm:$0xff] %vm250, %v239
          %252 = vst.msk [vmem:[%s151 + $0x10] sm:$0xff] %vm250, %v241
          %253 = vst.msk [vmem:[%s151 + $0x20] sm:$0xff] %vm250, %v243
          %254 = vst.msk [vmem:[%s151 + $0x30] sm:$0xff] %vm250, %v245
          %255 = vrot.lane.b32.xlu0 %v157, 96
          %v256 = vpop.permute.xlu0 %255
          %257 = vrot.lane.b32.xlu0 %v158, 96
          %v258 = vpop.permute.xlu0 %257
          %259 = vrot.lane.b32.xlu0 %v159, 96
          %v260 = vpop.permute.xlu0 %259
          %261 = vrot.lane.b32.xlu0 %v160, 96
          %v262 = vpop.permute.xlu0 %261
          %vm267 = vcmask 917248
          %268 = vst.msk [vmem:[%s151] sm:$0xff] %vm267, %v256
          %269 = vst.msk [vmem:[%s151 + $0x10] sm:$0xff] %vm267, %v258
          %270 = vst.msk [vmem:[%s151 + $0x20] sm:$0xff] %vm267, %v260
          %271 = vst.msk [vmem:[%s151 + $0x30] sm:$0xff] %vm267, %v262
          %272 = vrot.lane.b32.xlu0 %v157, 112
          %v273 = vpop.permute.xlu0 %272
          %274 = vrot.lane.b32.xlu0 %v158, 112
          %v275 = vpop.permute.xlu0 %274
          %276 = vrot.lane.b32.xlu0 %v159, 112
          %v277 = vpop.permute.xlu0 %276
          %278 = vrot.lane.b32.xlu0 %v160, 112
          %v279 = vpop.permute.xlu0 %278
          %vm284 = vcmask 1048448
          %285 = vst.msk [vmem:[%s151] sm:$0xff] %vm284, %v273
          %286 = vst.msk [vmem:[%s151 + $0x10] sm:$0xff] %vm284, %v275
          %287 = vst.msk [vmem:[%s151 + $0x20] sm:$0xff] %vm284, %v277
          %288 = vst.msk [vmem:[%s151 + $0x30] sm:$0xff] %vm284, %v279
          %289 = vst.msk [vmem:[%s151 + $0x8] sm:$0xff] %vm161, %v157
          %290 = vst.msk [vmem:[%s151 + $0x18] sm:$0xff] %vm161, %v158
          %291 = vst.msk [vmem:[%s151 + $0x28] sm:$0xff] %vm161, %v159
          %292 = vst.msk [vmem:[%s151 + $0x38] sm:$0xff] %vm161, %v160
          %293 = vst.msk [vmem:[%s151 + $0x8] sm:$0xff] %vm182, %v171
          %294 = vst.msk [vmem:[%s151 + $0x18] sm:$0xff] %vm182, %v173
          %295 = vst.msk [vmem:[%s151 + $0x28] sm:$0xff] %vm182, %v175
          %296 = vst.msk [vmem:[%s151 + $0x38] sm:$0xff] %vm182, %v177
          %297 = vst.msk [vmem:[%s151 + $0x8] sm:$0xff] %vm199, %v188
          %298 = vst.msk [vmem:[%s151 + $0x18] sm:$0xff] %vm199, %v190
          %299 = vst.msk [vmem:[%s151 + $0x28] sm:$0xff] %vm199, %v192
          %300 = vst.msk [vmem:[%s151 + $0x38] sm:$0xff] %vm199, %v194
          %301 = vst.msk [vmem:[%s151 + $0x8] sm:$0xff] %vm216, %v205
          %302 = vst.msk [vmem:[%s151 + $0x18] sm:$0xff] %vm216, %v207
          %303 = vst.msk [vmem:[%s151 + $0x28] sm:$0xff] %vm216, %v209
          %304 = vst.msk [vmem:[%s151 + $0x38] sm:$0xff] %vm216, %v211
          %305 = vst.msk [vmem:[%s151 + $0x8] sm:$0xff] %vm233, %v222
          %306 = vst.msk [vmem:[%s151 + $0x18] sm:$0xff] %vm233, %v224
          %307 = vst.msk [vmem:[%s151 + $0x28] sm:$0xff] %vm233, %v226
          %308 = vst.msk [vmem:[%s151 + $0x38] sm:$0xff] %vm233, %v228
          %309 = vst.msk [vmem:[%s151 + $0x8] sm:$0xff] %vm250, %v239
          %310 = vst.msk [vmem:[%s151 + $0x18] sm:$0xff] %vm250, %v241
          %311 = vst.msk [vmem:[%s151 + $0x28] sm:$0xff] %vm250, %v243
          %312 = vst.msk [vmem:[%s151 + $0x38] sm:$0xff] %vm250, %v245
          %313 = vst.msk [vmem:[%s151 + $0x8] sm:$0xff] %vm267, %v256
          %314 = vst.msk [vmem:[%s151 + $0x18] sm:$0xff] %vm267, %v258
          %315 = vst.msk [vmem:[%s151 + $0x28] sm:$0xff] %vm267, %v260
          %316 = vst.msk [vmem:[%s151 + $0x38] sm:$0xff] %vm267, %v262
          %317 = vst.msk [vmem:[%s151 + $0x8] sm:$0xff] %vm284, %v273
          %318 = vst.msk [vmem:[%s151 + $0x18] sm:$0xff] %vm284, %v275
          %319 = vst.msk [vmem:[%s151 + $0x28] sm:$0xff] %vm284, %v277
          %320 = vst.msk [vmem:[%s151 + $0x38] sm:$0xff] %vm284, %v279
        $region40: #{tpu_custom_call.1} parent=27 // pred_fallthru
          _
        %p321 = scmp.eq.s32.totalorder %s18, 1
        // Predicated region
        $region41: #{tpu_custom_call.1} parent=27 // pred_check
          %p322 = pneg %p321
        $region42: #{tpu_custom_call.1} parent=27 // pred_check_branch
          %324 = sbr.rel (%p322) target = $region44
        $region43: #{tpu_custom_call.1} parent=27 // pred_region
          %v325 = vld [vmem:[#allocation5] sm:$0xff]
          %v326 = vld [vmem:[#allocation5 + $0x8] sm:$0xff]
          %v327 = vld [vmem:[#allocation5 + $0x10] sm:$0xff]
          %v328 = vld [vmem:[#allocation5 + $0x18] sm:$0xff]
          %330 = vset.pattern.permute.xlu0 0
          %331 = vperm.xlu0 %330, %v325
          %v332 = vpop.permute.xlu0 %331
          %335 = vset.pattern.permute.xlu0 0
          %336 = vperm.xlu0 %335, %v326
          %v337 = vpop.permute.xlu0 %336
          %340 = vset.pattern.permute.xlu0 0
          %341 = vperm.xlu0 %340, %v327
          %v342 = vpop.permute.xlu0 %341
          %345 = vset.pattern.permute.xlu0 0
          %346 = vperm.xlu0 %345, %v328
          %v347 = vpop.permute.xlu0 %346
          %vm349 = vcmask 130048
          %350 = vst.msk [vmem:[%s151] sm:$0xff] %vm349, %v332
          %351 = vst.msk [vmem:[%s151 + $0x10] sm:$0xff] %vm349, %v337
          %352 = vst.msk [vmem:[%s151 + $0x20] sm:$0xff] %vm349, %v342
          %353 = vst.msk [vmem:[%s151 + $0x30] sm:$0xff] %vm349, %v347
          %354 = vset.pattern.permute.xlu0 1
          %355 = vperm.xlu0 %354, %v325
          %v356 = vpop.permute.xlu0 %355
          %358 = vset.pattern.permute.xlu0 1
          %359 = vperm.xlu0 %358, %v326
          %v360 = vpop.permute.xlu0 %359
          %362 = vset.pattern.permute.xlu0 1
          %363 = vperm.xlu0 %362, %v327
          %v364 = vpop.permute.xlu0 %363
          %366 = vset.pattern.permute.xlu0 1
          %367 = vperm.xlu0 %366, %v328
          %v368 = vpop.permute.xlu0 %367
          %vm370 = vcmask 261248
          %371 = vst.msk [vmem:[%s151] sm:$0xff] %vm370, %v356
          %372 = vst.msk [vmem:[%s151 + $0x10] sm:$0xff] %vm370, %v360
          %373 = vst.msk [vmem:[%s151 + $0x20] sm:$0xff] %vm370, %v364
          %374 = vst.msk [vmem:[%s151 + $0x30] sm:$0xff] %vm370, %v368
          %375 = vset.pattern.permute.xlu0 2
          %376 = vperm.xlu0 %375, %v325
          %v377 = vpop.permute.xlu0 %376
          %379 = vset.pattern.permute.xlu0 2
          %380 = vperm.xlu0 %379, %v326
          %v381 = vpop.permute.xlu0 %380
          %383 = vset.pattern.permute.xlu0 2
          %384 = vperm.xlu0 %383, %v327
          %v385 = vpop.permute.xlu0 %384
          %387 = vset.pattern.permute.xlu0 2
          %388 = vperm.xlu0 %387, %v328
          %v389 = vpop.permute.xlu0 %388
          %vm391 = vcmask 392448
          %392 = vst.msk [vmem:[%s151] sm:$0xff] %vm391, %v377
          %393 = vst.msk [vmem:[%s151 + $0x10] sm:$0xff] %vm391, %v381
          %394 = vst.msk [vmem:[%s151 + $0x20] sm:$0xff] %vm391, %v385
          %395 = vst.msk [vmem:[%s151 + $0x30] sm:$0xff] %vm391, %v389
          %396 = vset.pattern.permute.xlu0 3
          %397 = vperm.xlu0 %396, %v325
          %v398 = vpop.permute.xlu0 %397
          %400 = vset.pattern.permute.xlu0 3
          %401 = vperm.xlu0 %400, %v326
          %v402 = vpop.permute.xlu0 %401
          %404 = vset.pattern.permute.xlu0 3
          %405 = vperm.xlu0 %404, %v327
          %v406 = vpop.permute.xlu0 %405
          %408 = vset.pattern.permute.xlu0 3
          %409 = vperm.xlu0 %408, %v328
          %v410 = vpop.permute.xlu0 %409
          %vm412 = vcmask 523648
          %413 = vst.msk [vmem:[%s151] sm:$0xff] %vm412, %v398
          %414 = vst.msk [vmem:[%s151 + $0x10] sm:$0xff] %vm412, %v402
          %415 = vst.msk [vmem:[%s151 + $0x20] sm:$0xff] %vm412, %v406
          %416 = vst.msk [vmem:[%s151 + $0x30] sm:$0xff] %vm412, %v410
          %417 = vset.pattern.permute.xlu0 4
          %418 = vperm.xlu0 %417, %v325
          %v419 = vpop.permute.xlu0 %418
          %421 = vset.pattern.permute.xlu0 4
          %422 = vperm.xlu0 %421, %v326
          %v423 = vpop.permute.xlu0 %422
          %425 = vset.pattern.permute.xlu0 4
          %426 = vperm.xlu0 %425, %v327
          %v427 = vpop.permute.xlu0 %426
          %429 = vset.pattern.permute.xlu0 4
          %430 = vperm.xlu0 %429, %v328
          %v431 = vpop.permute.xlu0 %430
          %vm433 = vcmask 654848
          %434 = vst.msk [vmem:[%s151] sm:$0xff] %vm433, %v419
          %435 = vst.msk [vmem:[%s151 + $0x10] sm:$0xff] %vm433, %v423
          %436 = vst.msk [vmem:[%s151 + $0x20] sm:$0xff] %vm433, %v427
          %437 = vst.msk [vmem:[%s151 + $0x30] sm:$0xff] %vm433, %v431
          %438 = vset.pattern.permute.xlu0 5
          %439 = vperm.xlu0 %438, %v325
          %v440 = vpop.permute.xlu0 %439
          %442 = vset.pattern.permute.xlu0 5
          %443 = vperm.xlu0 %442, %v326
          %v444 = vpop.permute.xlu0 %443
          %446 = vset.pattern.permute.xlu0 5
          %447 = vperm.xlu0 %446, %v327
          %v448 = vpop.permute.xlu0 %447
          %450 = vset.pattern.permute.xlu0 5
          %451 = vperm.xlu0 %450, %v328
          %v452 = vpop.permute.xlu0 %451
          %vm454 = vcmask 786048
          %455 = vst.msk [vmem:[%s151] sm:$0xff] %vm454, %v440
          %456 = vst.msk [vmem:[%s151 + $0x10] sm:$0xff] %vm454, %v444
          %457 = vst.msk [vmem:[%s151 + $0x20] sm:$0xff] %vm454, %v448
          %458 = vst.msk [vmem:[%s151 + $0x30] sm:$0xff] %vm454, %v452
          %459 = vset.pattern.permute.xlu0 6
          %460 = vperm.xlu0 %459, %v325
          %v461 = vpop.permute.xlu0 %460
          %463 = vset.pattern.permute.xlu0 6
          %464 = vperm.xlu0 %463, %v326
          %v465 = vpop.permute.xlu0 %464
          %467 = vset.pattern.permute.xlu0 6
          %468 = vperm.xlu0 %467, %v327
          %v469 = vpop.permute.xlu0 %468
          %471 = vset.pattern.permute.xlu0 6
          %472 = vperm.xlu0 %471, %v328
          %v473 = vpop.permute.xlu0 %472
          %vm475 = vcmask 917248
          %476 = vst.msk [vmem:[%s151] sm:$0xff] %vm475, %v461
          %477 = vst.msk [vmem:[%s151 + $0x10] sm:$0xff] %vm475, %v465
          %478 = vst.msk [vmem:[%s151 + $0x20] sm:$0xff] %vm475, %v469
          %479 = vst.msk [vmem:[%s151 + $0x30] sm:$0xff] %vm475, %v473
          %480 = vset.pattern.permute.xlu0 7
          %481 = vperm.xlu0 %480, %v325
          %v482 = vpop.permute.xlu0 %481
          %484 = vset.pattern.permute.xlu0 7
          %485 = vperm.xlu0 %484, %v326
          %v486 = vpop.permute.xlu0 %485
          %488 = vset.pattern.permute.xlu0 7
          %489 = vperm.xlu0 %488, %v327
          %v490 = vpop.permute.xlu0 %489
          %492 = vset.pattern.permute.xlu0 7
          %493 = vperm.xlu0 %492, %v328
          %v494 = vpop.permute.xlu0 %493
          %vm496 = vcmask 1048448
          %497 = vst.msk [vmem:[%s151] sm:$0xff] %vm496, %v482
          %498 = vst.msk [vmem:[%s151 + $0x10] sm:$0xff] %vm496, %v486
          %499 = vst.msk [vmem:[%s151 + $0x20] sm:$0xff] %vm496, %v490
          %500 = vst.msk [vmem:[%s151 + $0x30] sm:$0xff] %vm496, %v494
          %501 = vset.pattern.permute.xlu0 8
          %502 = vperm.xlu0 %501, %v325
          %v503 = vpop.permute.xlu0 %502
          %505 = vset.pattern.permute.xlu0 8
          %506 = vperm.xlu0 %505, %v326
          %v507 = vpop.permute.xlu0 %506
          %509 = vset.pattern.permute.xlu0 8
          %510 = vperm.xlu0 %509, %v327
          %v511 = vpop.permute.xlu0 %510
          %513 = vset.pattern.permute.xlu0 8
          %514 = vperm.xlu0 %513, %v328
          %v515 = vpop.permute.xlu0 %514
          %517 = vst.msk [vmem:[%s151 + $0x8] sm:$0xff] %vm349, %v503
          %518 = vst.msk [vmem:[%s151 + $0x18] sm:$0xff] %vm349, %v507
          %519 = vst.msk [vmem:[%s151 + $0x28] sm:$0xff] %vm349, %v511
          %520 = vst.msk [vmem:[%s151 + $0x38] sm:$0xff] %vm349, %v515
          %521 = vset.pattern.permute.xlu0 9
          %522 = vperm.xlu0 %521, %v325
          %v523 = vpop.permute.xlu0 %522
          %525 = vset.pattern.permute.xlu0 9
          %526 = vperm.xlu0 %525, %v326
          %v527 = vpop.permute.xlu0 %526
          %529 = vset.pattern.permute.xlu0 9
          %530 = vperm.xlu0 %529, %v327
          %v531 = vpop.permute.xlu0 %530
          %533 = vset.pattern.permute.xlu0 9
          %534 = vperm.xlu0 %533, %v328
          %v535 = vpop.permute.xlu0 %534
          %537 = vst.msk [vmem:[%s151 + $0x8] sm:$0xff] %vm370, %v523
          %538 = vst.msk [vmem:[%s151 + $0x18] sm:$0xff] %vm370, %v527
          %539 = vst.msk [vmem:[%s151 + $0x28] sm:$0xff] %vm370, %v531
          %540 = vst.msk [vmem:[%s151 + $0x38] sm:$0xff] %vm370, %v535
          %541 = vset.pattern.permute.xlu0 10
          %542 = vperm.xlu0 %541, %v325
          %v543 = vpop.permute.xlu0 %542
          %545 = vset.pattern.permute.xlu0 10
          %546 = vperm.xlu0 %545, %v326
          %v547 = vpop.permute.xlu0 %546
          %549 = vset.pattern.permute.xlu0 10
          %550 = vperm.xlu0 %549, %v327
          %v551 = vpop.permute.xlu0 %550
          %553 = vset.pattern.permute.xlu0 10
          %554 = vperm.xlu0 %553, %v328
          %v555 = vpop.permute.xlu0 %554
          %557 = vst.msk [vmem:[%s151 + $0x8] sm:$0xff] %vm391, %v543
          %558 = vst.msk [vmem:[%s151 + $0x18] sm:$0xff] %vm391, %v547
          %559 = vst.msk [vmem:[%s151 + $0x28] sm:$0xff] %vm391, %v551
          %560 = vst.msk [vmem:[%s151 + $0x38] sm:$0xff] %vm391, %v555
          %561 = vset.pattern.permute.xlu0 11
          %562 = vperm.xlu0 %561, %v325
          %v563 = vpop.permute.xlu0 %562
          %565 = vset.pattern.permute.xlu0 11
          %566 = vperm.xlu0 %565, %v326
          %v567 = vpop.permute.xlu0 %566
          %569 = vset.pattern.permute.xlu0 11
          %570 = vperm.xlu0 %569, %v327
          %v571 = vpop.permute.xlu0 %570
          %573 = vset.pattern.permute.xlu0 11
          %574 = vperm.xlu0 %573, %v328
          %v575 = vpop.permute.xlu0 %574
          %577 = vst.msk [vmem:[%s151 + $0x8] sm:$0xff] %vm412, %v563
          %578 = vst.msk [vmem:[%s151 + $0x18] sm:$0xff] %vm412, %v567
          %579 = vst.msk [vmem:[%s151 + $0x28] sm:$0xff] %vm412, %v571
          %580 = vst.msk [vmem:[%s151 + $0x38] sm:$0xff] %vm412, %v575
          %581 = vset.pattern.permute.xlu0 12
          %582 = vperm.xlu0 %581, %v325
          %v583 = vpop.permute.xlu0 %582
          %585 = vset.pattern.permute.xlu0 12
          %586 = vperm.xlu0 %585, %v326
          %v587 = vpop.permute.xlu0 %586
          %589 = vset.pattern.permute.xlu0 12
          %590 = vperm.xlu0 %589, %v327
          %v591 = vpop.permute.xlu0 %590
          %593 = vset.pattern.permute.xlu0 12
          %594 = vperm.xlu0 %593, %v328
          %v595 = vpop.permute.xlu0 %594
          %597 = vst.msk [vmem:[%s151 + $0x8] sm:$0xff] %vm433, %v583
          %598 = vst.msk [vmem:[%s151 + $0x18] sm:$0xff] %vm433, %v587
          %599 = vst.msk [vmem:[%s151 + $0x28] sm:$0xff] %vm433, %v591
          %600 = vst.msk [vmem:[%s151 + $0x38] sm:$0xff] %vm433, %v595
          %601 = vset.pattern.permute.xlu0 13
          %602 = vperm.xlu0 %601, %v325
          %v603 = vpop.permute.xlu0 %602
          %605 = vset.pattern.permute.xlu0 13
          %606 = vperm.xlu0 %605, %v326
          %v607 = vpop.permute.xlu0 %606
          %609 = vset.pattern.permute.xlu0 13
          %610 = vperm.xlu0 %609, %v327
          %v611 = vpop.permute.xlu0 %610
          %613 = vset.pattern.permute.xlu0 13
          %614 = vperm.xlu0 %613, %v328
          %v615 = vpop.permute.xlu0 %614
          %617 = vst.msk [vmem:[%s151 + $0x8] sm:$0xff] %vm454, %v603
          %618 = vst.msk [vmem:[%s151 + $0x18] sm:$0xff] %vm454, %v607
          %619 = vst.msk [vmem:[%s151 + $0x28] sm:$0xff] %vm454, %v611
          %620 = vst.msk [vmem:[%s151 + $0x38] sm:$0xff] %vm454, %v615
          %621 = vset.pattern.permute.xlu0 14
          %622 = vperm.xlu0 %621, %v325
          %v623 = vpop.permute.xlu0 %622
          %625 = vset.pattern.permute.xlu0 14
          %626 = vperm.xlu0 %625, %v326
          %v627 = vpop.permute.xlu0 %626
          %629 = vset.pattern.permute.xlu0 14
          %630 = vperm.xlu0 %629, %v327
          %v631 = vpop.permute.xlu0 %630
          %633 = vset.pattern.permute.xlu0 14
          %634 = vperm.xlu0 %633, %v328
          %v635 = vpop.permute.xlu0 %634
          %637 = vst.msk [vmem:[%s151 + $0x8] sm:$0xff] %vm475, %v623
          %638 = vst.msk [vmem:[%s151 + $0x18] sm:$0xff] %vm475, %v627
          %639 = vst.msk [vmem:[%s151 + $0x28] sm:$0xff] %vm475, %v631
          %640 = vst.msk [vmem:[%s151 + $0x38] sm:$0xff] %vm475, %v635
          %641 = vset.pattern.permute.xlu0 15
          %642 = vperm.xlu0 %641, %v325
          %v643 = vpop.permute.xlu0 %642
          %645 = vset.pattern.permute.xlu0 15
          %646 = vperm.xlu0 %645, %v326
          %v647 = vpop.permute.xlu0 %646
          %649 = vset.pattern.permute.xlu0 15
          %650 = vperm.xlu0 %649, %v327
          %v651 = vpop.permute.xlu0 %650
          %653 = vset.pattern.permute.xlu0 15
          %654 = vperm.xlu0 %653, %v328
          %v655 = vpop.permute.xlu0 %654
          %657 = vst.msk [vmem:[%s151 + $0x8] sm:$0xff] %vm496, %v643
          %658 = vst.msk [vmem:[%s151 + $0x18] sm:$0xff] %vm496, %v647
          %659 = vst.msk [vmem:[%s151 + $0x28] sm:$0xff] %vm496, %v651
          %660 = vst.msk [vmem:[%s151 + $0x38] sm:$0xff] %vm496, %v655
        $region44: #{tpu_custom_call.1} parent=27 // pred_fallthru
          _
        %s661 = sand.u32 %s68, 1
        %s662 = scalar_lea.sflag [#allocation4], %s661
        %s663 = sand.u32 %s68, 1
        %s664 = smul.addr %s663, 64
        %s665 = scalar_lea.vmem [#allocation7], %s664
        // Predicated region
        $region45: #{tpu_custom_call.1} parent=27 // pred_check
          %p666 = pneg %p78
        $region46: #{tpu_custom_call.1} parent=27 // pred_check_branch
          %668 = sbr.rel (%p666) target = $region48
        $region47: #{tpu_custom_call.1} parent=27 // pred_region
          %s669 = smul.u32 4, %s18
          %s671 = ssub.s32 1024, 1024
          %672 = vsyncadd %s662, %s671
          %s673 = smul.addr %s669, 2
          %s674 = smul.addr %s673, 128
          %s675 = scalar_lea.hbm %s2, %s674
          %s676 = sshll.u32 %s665, 4
          %s677 = int_to_ptr.vmem [resolvable:$true] %s676
          %682 = dma.vmem_to_hbm [thread:$0]  %s677, 1024, %s675, %s662, 256, 256, 16
        $region48: #{tpu_custom_call.1} parent=27 // pred_fallthru
          _
      $region28: #{tpu_custom_call.1} parent=5 // pred_fallthru
        _
      %p683 = scmp.le.s32.totalorder 2, %s13
      // Predicated region
      $region49: #{tpu_custom_call.1} parent=5 // pred_check
        %p684 = pneg %p683
      $region50: #{tpu_custom_call.1} parent=5 // pred_check_branch
        %686 = sbr.rel (%p684) target = $region52
      $region51: #{tpu_custom_call.1} parent=5 // pred_region
        %s687 = ssub.s32 %s13, 2
        // Predicated region
        $region53: #{tpu_custom_call.1} parent=51 // pred_check
          %p688 = pneg %p84
        $region54: #{tpu_custom_call.1} parent=51 // pred_check_branch
          %690 = sbr.rel (%p688) target = $region56
        $region55: #{tpu_custom_call.1} parent=51 // pred_region
          %s691 = sand.u32 %s69, 1
          %s692 = scalar_lea.sflag [#allocation4], %s691
          %s693 = sand.u32 %s69, 1
          %s694 = smul.addr %s693, 64
          %s695 = scalar_lea.vmem [#allocation7], %s694
          %696 = dma.done %s692, 1024
        $region56: #{tpu_custom_call.1} parent=51 // pred_fallthru
          _
      $region52: #{tpu_custom_call.1} parent=5 // pred_fallthru
        _
    $region6: #{tpu_custom_call.1} parent=1 // loop_footer
      %s17 = sadd.s32 1, %s13
    $region7: #{tpu_custom_call.1} parent=1 // loop_footer_branch
      %12 = sbr.rel target = $region3
    $region8: #{tpu_custom_call.1} parent=1 // loop_exit
      _
    %697 = vsyncpa [#allocation3], 1
    %s698 = scalar_lea.sflag [#allocation3], 1
    %699 = vsyncpa %s698, 1
    %700 = vsyncpa [#allocation6], 1
    %701 = vsyncpa [#allocation4], 1
    %s702 = scalar_lea.sflag [#allocation4], 1
    %703 = vsyncpa %s702, 1

</llo_original>
